<compile_context>
chip_gen: v7x
topology: tpu7x:2x2x1
jax: 0.10.0
libtpu: 0.0.40
codegen_flags: <defaults>
</compile_context>

<pallas_src>
import jax
import jax.numpy as jnp
from jax.experimental import pallas as pl
from jax.experimental.pallas import tpu as pltpu


def _round_up(x, m):
    return (x + m - 1) // m * m


def _tpu_generation():
    """Host-side TPU generation query: (generation or None, tensorcores/chip)."""
    kind = ""
    try:
        kind = (getattr(jax.devices()[0], "device_kind", "") or "").lower()
    except Exception:
        pass
    gen = None
    for g in (7, 6, 5, 4):
        if "v%d" % g in kind:
            gen = g
            break
    num_tc = 2 if (gen is not None and gen >= 7) else 1
    return gen, num_tc


def branch_mlp_kernel(x_ref,
                      w0_ref, b0_ref,      # init_fc
                      w1_ref, b1_ref,      # resblock.fc1
                      w2_ref, b2_ref,      # resblock.fc2
                      wf_ref, bf_ref,      # final_fc (lane-padded)
                      o_ref):
    x = x_ref[...]                                               # bf16 (tile_b, in_pad)

    # init_fc + ReLU   (bf16 MXU inputs, fp32 accumulation)
    h = jnp.dot(x, w0_ref[...], preferred_element_type=jnp.float32) + b0_ref[...]
    h = jnp.maximum(h, 0.0)                                      # fp32 residual carrier

    # ResidualBlock (in_dim == out_dim -> no shortcut linear)
    r = jnp.dot(h.astype(jnp.bfloat16), w1_ref[...],
                preferred_element_type=jnp.float32) + b1_ref[...]
    r = jnp.maximum(r, 0.0)
    r = jnp.dot(r.astype(jnp.bfloat16), w2_ref[...],
                preferred_element_type=jnp.float32) + b2_ref[...]
    h = jnp.maximum(r + h, 0.0)

    # final_fc -> lane-padded (multiple-of-128) output, unmasked lane-dense stores
    o_ref[...] = (jnp.dot(h.astype(jnp.bfloat16), wf_ref[...],
                          preferred_element_type=jnp.float32) + bf_ref[...]
                  ).astype(o_ref.dtype)


def prepare_params(params):
    """One-time parameter prep: bf16 casts + lane padding (hoisted out of the call).

    params: fp32 dict with (in,out)-layout weights w0/w1/w2/wf and (1,out) biases.
    Returns a dict of device arrays + static dims, ready for branch_mlp().
    """
    in_dim, h0 = params["w0"].shape
    h1 = params["w1"].shape[1]
    out_dim = params["wf"].shape[1]
    assert params["w1"].shape[0] == h0 and params["w2"].shape == (h1, h1)
    assert params["wf"].shape[0] == h1

    in_pad = _round_up(in_dim, 128)    # lane-dense K for the dominant matmul
    out_pad = _round_up(out_dim, 128)  # lane-dense unmasked output stores

    prep = dict(
        w0=jnp.pad(params["w0"], ((0, in_pad - in_dim), (0, 0))).astype(jnp.bfloat16),
        w1=params["w1"].astype(jnp.bfloat16),
        w2=params["w2"].astype(jnp.bfloat16),
        wf=jnp.pad(params["wf"], ((0, 0), (0, out_pad - out_dim))).astype(jnp.bfloat16),
        b0=params["b0"].astype(jnp.float32),
        b1=params["b1"].astype(jnp.float32),
        b2=params["b2"].astype(jnp.float32),
        bf=jnp.pad(params["bf"], ((0, 0), (0, out_pad - out_dim))).astype(jnp.float32),
        in_dim=in_dim, in_pad=in_pad, h0=h0, h1=h1,
        out_dim=out_dim, out_pad=out_pad,
    )
    return prep


def branch_mlp(x, prep, *, tile_b=None):
    """x: (B, in_dim) float32.  prep: output of prepare_params()."""
    B, in_dim = x.shape
    assert in_dim == prep["in_dim"]
    in_pad, h0, h1 = prep["in_pad"], prep["h0"], prep["h1"]
    out_dim, out_pad = prep["out_dim"], prep["out_pad"]

    gen, num_tc = _tpu_generation()

    # ---- balanced, generation-aware batch tiling ---------------------------
    if tile_b is None:
        base = 512 if gen == 6 else 256          # v6e: bigger tiles (128 MiB VMEM)
        n_tiles = max(1, (B + base - 1) // base)
        if num_tc >= 2:                          # v7x: feed both TensorCores
            n_tiles = max(2, _round_up(n_tiles, 2))
        tile_b = _round_up(-(-B // n_tiles), 16)  # ceil-div, then sublane-align
    else:
        tile_b = _round_up(int(tile_b), 16)
        n_tiles = max(1, (B + tile_b - 1) // tile_b)
    B_pad = n_tiles * tile_b

    # ---- per-call input prep (rows padded to B_pad, lanes padded to in_pad) -
    x_bf = jnp.pad(x, ((0, B_pad - B), (0, in_pad - in_dim))).astype(jnp.bfloat16)

    w0, b0 = prep["w0"], prep["b0"]
    w1, b1 = prep["w1"], prep["b1"]
    w2, b2 = prep["w2"], prep["b2"]
    wf, bf = prep["wf"], prep["bf"]

    # ---- VMEM budget (generation-aware cap) ---------------------------------
    weight_bytes = sum(int(a.size) * a.dtype.itemsize for a in (w0, w1, w2, wf))
    bias_bytes = sum(int(a.size) * a.dtype.itemsize for a in (b0, b1, b2, bf))
    vmem_est = (2 * (weight_bytes + bias_bytes)   # constant-indexed, double-buffered
                + 2 * tile_b * in_pad * 2         # x tile, double-buffered bf16
                + 2 * tile_b * out_pad * 4        # out tile, double-buffered f32
                + 6 * tile_b * max(h0, h1) * 4)   # fp32/bf16 intermediates headroom
    if gen == 7:
        vmem_cap = 40 << 20    # 64 MiB physical per TC on v7x -> stay well under
    elif gen == 6:
        vmem_cap = 64 << 20    # 128 MiB physical
    else:
        vmem_cap = 48 << 20    # v5e / unknown: explicit (scoped default is 16 MiB)
    vmem_limit = int(min(max(int(1.5 * vmem_est), 16 << 20), vmem_cap))

    flops = 2 * B_pad * (in_pad * h0 + h0 * h1 + h1 * h1 + h1 * out_pad)
    bytes_accessed = int(weight_bytes + bias_bytes
                         + x_bf.size * 2 + B_pad * out_pad * 4)
    cost = pl.CostEstimate(flops=flops, transcendentals=0,
                           bytes_accessed=bytes_accessed)

    def const_spec(shape):
        # Whole (small) weight/bias resident in VMEM; constant index_map means it
        # is DMA'd once and never re-fetched across the batch grid.
        return pl.BlockSpec(shape, lambda i: (0, 0))

    out = pl.pallas_call(
        branch_mlp_kernel,
        out_shape=jax.ShapeDtypeStruct((B_pad, out_pad), jnp.float32),
        grid_spec=pltpu.PrefetchScalarGridSpec(
            num_scalar_prefetch=0,
            grid=(n_tiles,),
            in_specs=[
                pl.BlockSpec((tile_b, in_pad), lambda i: (i, 0)),      # x tile
                const_spec((in_pad, h0)),   const_spec((1, h0)),       # init_fc
                const_spec((h0, h1)),       const_spec((1, h1)),       # fc1
                const_spec((h1, h1)),       const_spec((1, h1)),       # fc2
                const_spec((h1, out_pad)),  const_spec((1, out_pad)),  # final_fc
            ],
            out_specs=pl.BlockSpec((tile_b, out_pad), lambda i: (i, 0)),
        ),
        compiler_params=pltpu.CompilerParams(
            dimension_semantics=("parallel",),
            vmem_limit_bytes=vmem_limit),
        cost_estimate=cost,
    )(x_bf, w0, b0, w1, b1, w2, b2, wf, bf)

    return out[:B, :out_dim]


def init_params(key, in_dim, hidden_dims, out_dim):
    """Deterministic synthetic fp32 params (shapes match BranchMLP.__init__).

    hidden_dims = [H0, H1] with H0 == H1, so the single ResidualBlock has no
    shortcut linear (the default BranchMLP configuration).
    """
    h0, h1 = hidden_dims
    ks = jax.random.split(key, 8)

    def lin(kw, kb, fan_in, fan_out):
        w = jax.random.normal(kw, (fan_in, fan_out), jnp.float32) * (1.0 / jnp.sqrt(fan_in))
        b = jax.random.normal(kb, (1, fan_out), jnp.float32) * 0.01
        return w, b

    w0, b0 = lin(ks[0], ks[1], in_dim, h0)   # init_fc
    w1, b1 = lin(ks[2], ks[3], h0, h1)       # resblock.fc1
    w2, b2 = lin(ks[4], ks[5], h1, h1)       # resblock.fc2
    wf, bf = lin(ks[6], ks[7], h1, out_dim)  # final_fc
    return dict(w0=w0, b0=b0, w1=w1, b1=b1, w2=w2, b2=b2, wf=wf, bf=bf)


def branch_mlp_ref(x, p):
    """Pure-JAX reference matching the kernel's bf16-input / fp32-accumulate math."""
    def mm(a, w):
        return jnp.dot(a.astype(jnp.bfloat16), w.astype(jnp.bfloat16),
                       preferred_element_type=jnp.float32)
    h = jnp.maximum(mm(x, p["w0"]) + p["b0"], 0.0)
    r = jnp.maximum(mm(h, p["w1"]) + p["b1"], 0.0)
    r = mm(r, p["w2"]) + p["b2"]
    h = jnp.maximum(r + h, 0.0)
    return mm(h, p["wf"]) + p["bf"]


if __name__ == "__main__":
    # Small shapes consistent with the module structure
    # (original defaults: in_dim=68*68, hidden=[512,512], out_dim=68).
    B, IN_DIM, HIDDEN, OUT_DIM = 16, 256, [128, 128], 68

    key = jax.random.PRNGKey(0)
    kx, kp = jax.random.split(key)
    x = jax.random.normal(kx, (B, IN_DIM), jnp.float32)
    params = init_params(kp, IN_DIM, HIDDEN, OUT_DIM)

    prep = prepare_params(params)         # one-time weight cast + lane padding
    out = branch_mlp(x, prep)
    out = jax.block_until_ready(out)

    ref = branch_mlp_ref(x, params)
    assert out.shape == (B, OUT_DIM)
    assert jnp.allclose(out, ref, atol=1e-2, rtol=1e-2), float(jnp.max(jnp.abs(out - ref)))

    print("KERNEL_OK")
</pallas_src>

<mosaic_0001>
module attributes {stable_mosaic.version = 11 : i64} {
  func.func @branch_mlp_kernel(%arg0: i32, %arg1: memref<16x256xbf16, #tpu.memory_space<vmem>>, %arg2: memref<256x128xbf16, #tpu.memory_space<vmem>>, %arg3: memref<1x128xf32, #tpu.memory_space<vmem>>, %arg4: memref<128x128xbf16, #tpu.memory_space<vmem>>, %arg5: memref<1x128xf32, #tpu.memory_space<vmem>>, %arg6: memref<128x128xbf16, #tpu.memory_space<vmem>>, %arg7: memref<1x128xf32, #tpu.memory_space<vmem>>, %arg8: memref<128x128xbf16, #tpu.memory_space<vmem>>, %arg9: memref<1x128xf32, #tpu.memory_space<vmem>>, %arg10: memref<16x128xf32, #tpu.memory_space<vmem>>) attributes {dimension_semantics = [#tpu.dimension_semantics<parallel>], iteration_bounds = array<i64: 1>, scalar_prefetch = 0 : i64, scratch_operands = 0 : i64, tpu.core_type = #tpu.core_type<tc>, window_params = [{transform_indices = @transform_0, window_bounds = array<i64: 16, 256>}, {pipeline_mode = #tpu.pipeline_mode<synchronous>, transform_indices = @transform_1, window_bounds = array<i64: 256, 128>}, {pipeline_mode = #tpu.pipeline_mode<synchronous>, transform_indices = @transform_2, window_bounds = array<i64: 1, 128>}, {pipeline_mode = #tpu.pipeline_mode<synchronous>, transform_indices = @transform_3, window_bounds = array<i64: 128, 128>}, {pipeline_mode = #tpu.pipeline_mode<synchronous>, transform_indices = @transform_4, window_bounds = array<i64: 1, 128>}, {pipeline_mode = #tpu.pipeline_mode<synchronous>, transform_indices = @transform_5, window_bounds = array<i64: 128, 128>}, {pipeline_mode = #tpu.pipeline_mode<synchronous>, transform_indices = @transform_6, window_bounds = array<i64: 1, 128>}, {pipeline_mode = #tpu.pipeline_mode<synchronous>, transform_indices = @transform_7, window_bounds = array<i64: 128, 128>}, {pipeline_mode = #tpu.pipeline_mode<synchronous>, transform_indices = @transform_8, window_bounds = array<i64: 1, 128>}, {transform_indices = @transform_9, window_bounds = array<i64: 16, 128>}]} {
    %c0 = arith.constant 0 : index
    %c0_0 = arith.constant 0 : index
    %0 = vector.load %arg1[%c0, %c0_0] : memref<16x256xbf16, #tpu.memory_space<vmem>>, vector<16x256xbf16>
    %c0_1 = arith.constant 0 : index
    %c0_2 = arith.constant 0 : index
    %1 = vector.load %arg2[%c0_1, %c0_2] : memref<256x128xbf16, #tpu.memory_space<vmem>>, vector<256x128xbf16>
    %cst = arith.constant dense<0.000000e+00> : vector<16x128xf32>
    %2 = tpu.matmul %0, %1, %cst {dimension_numbers = #tpu.dot_dimension_numbers<[1], [0], [0], [1], [0, 0, 1, 1], [], []>} : vector<16x256xbf16>, vector<256x128xbf16>, vector<16x128xf32> -> vector<16x128xf32>
    %c0_3 = arith.constant 0 : index
    %c0_4 = arith.constant 0 : index
    %3 = vector.load %arg3[%c0_3, %c0_4] : memref<1x128xf32, #tpu.memory_space<vmem>>, vector<1x128xf32>
    %4 = vector.broadcast %3 : vector<1x128xf32> to vector<16x128xf32>
    %5 = arith.addf %2, %4 : vector<16x128xf32>
    %cst_5 = arith.constant 0.000000e+00 : f32
    %6 = vector.broadcast %cst_5 : f32 to vector<16x128xf32>
    %7 = arith.maximumf %5, %6 : vector<16x128xf32>
    %8 = arith.truncf %7 : vector<16x128xf32> to vector<16x128xbf16>
    %c0_6 = arith.constant 0 : index
    %c0_7 = arith.constant 0 : index
    %9 = vector.load %arg4[%c0_6, %c0_7] : memref<128x128xbf16, #tpu.memory_space<vmem>>, vector<128x128xbf16>
    %cst_8 = arith.constant dense<0.000000e+00> : vector<16x128xf32>
    %10 = tpu.matmul %8, %9, %cst_8 {dimension_numbers = #tpu.dot_dimension_numbers<[1], [0], [0], [1], [0, 0, 1, 1], [], []>} : vector<16x128xbf16>, vector<128x128xbf16>, vector<16x128xf32> -> vector<16x128xf32>
    %c0_9 = arith.constant 0 : index
    %c0_10 = arith.constant 0 : index
    %11 = vector.load %arg5[%c0_9, %c0_10] : memref<1x128xf32, #tpu.memory_space<vmem>>, vector<1x128xf32>
    %12 = vector.broadcast %11 : vector<1x128xf32> to vector<16x128xf32>
    %13 = arith.addf %10, %12 : vector<16x128xf32>
    %cst_11 = arith.constant 0.000000e+00 : f32
    %14 = vector.broadcast %cst_11 : f32 to vector<16x128xf32>
    %15 = arith.maximumf %13, %14 : vector<16x128xf32>
    %16 = arith.truncf %15 : vector<16x128xf32> to vector<16x128xbf16>
    %c0_12 = arith.constant 0 : index
    %c0_13 = arith.constant 0 : index
    %17 = vector.load %arg6[%c0_12, %c0_13] : memref<128x128xbf16, #tpu.memory_space<vmem>>, vector<128x128xbf16>
    %cst_14 = arith.constant dense<0.000000e+00> : vector<16x128xf32>
    %18 = tpu.matmul %16, %17, %cst_14 {dimension_numbers = #tpu.dot_dimension_numbers<[1], [0], [0], [1], [0, 0, 1, 1], [], []>} : vector<16x128xbf16>, vector<128x128xbf16>, vector<16x128xf32> -> vector<16x128xf32>
    %c0_15 = arith.constant 0 : index
    %c0_16 = arith.constant 0 : index
    %19 = vector.load %arg7[%c0_15, %c0_16] : memref<1x128xf32, #tpu.memory_space<vmem>>, vector<1x128xf32>
    %20 = vector.broadcast %19 : vector<1x128xf32> to vector<16x128xf32>
    %21 = arith.addf %18, %20 : vector<16x128xf32>
    %22 = arith.addf %21, %7 : vector<16x128xf32>
    %cst_17 = arith.constant 0.000000e+00 : f32
    %23 = vector.broadcast %cst_17 : f32 to vector<16x128xf32>
    %24 = arith.maximumf %22, %23 : vector<16x128xf32>
    %25 = arith.truncf %24 : vector<16x128xf32> to vector<16x128xbf16>
    %c0_18 = arith.constant 0 : index
    %c0_19 = arith.constant 0 : index
    %26 = vector.load %arg8[%c0_18, %c0_19] : memref<128x128xbf16, #tpu.memory_space<vmem>>, vector<128x128xbf16>
    %cst_20 = arith.constant dense<0.000000e+00> : vector<16x128xf32>
    %27 = tpu.matmul %25, %26, %cst_20 {dimension_numbers = #tpu.dot_dimension_numbers<[1], [0], [0], [1], [0, 0, 1, 1], [], []>} : vector<16x128xbf16>, vector<128x128xbf16>, vector<16x128xf32> -> vector<16x128xf32>
    %c0_21 = arith.constant 0 : index
    %c0_22 = arith.constant 0 : index
    %28 = vector.load %arg9[%c0_21, %c0_22] : memref<1x128xf32, #tpu.memory_space<vmem>>, vector<1x128xf32>
    %29 = vector.broadcast %28 : vector<1x128xf32> to vector<16x128xf32>
    %30 = arith.addf %27, %29 : vector<16x128xf32>
    %c0_23 = arith.constant 0 : index
    %c0_24 = arith.constant 0 : index
    %31 = vector.load %arg10[%c0_23, %c0_24] : memref<16x128xf32, #tpu.memory_space<vmem>>, vector<16x128xf32>
    tpu.vector_store %arg10[%c0_23, %c0_24], %30 {strides = array<i32>} : memref<16x128xf32, #tpu.memory_space<vmem>>, vector<16x128xf32>,
    return
  }
  func.func @transform_0(%arg0: i32) -> (i32, i32) {
    %c0_i32 = arith.constant 0 : i32
    %c0_i32_0 = arith.constant 0 : i32
    return %arg0, %c0_i32 : i32, i32
  }
  func.func @transform_1(%arg0: i32) -> (i32, i32) {
    %c0_i32 = arith.constant 0 : i32
    %c0_i32_0 = arith.constant 0 : i32
    %c0_i32_1 = arith.constant 0 : i32
    return %c0_i32, %c0_i32_0 : i32, i32
  }
  func.func @transform_2(%arg0: i32) -> (i32, i32) {
    %c0_i32 = arith.constant 0 : i32
    %c0_i32_0 = arith.constant 0 : i32
    %c0_i32_1 = arith.constant 0 : i32
    return %c0_i32, %c0_i32_0 : i32, i32
  }
  func.func @transform_3(%arg0: i32) -> (i32, i32) {
    %c0_i32 = arith.constant 0 : i32
    %c0_i32_0 = arith.constant 0 : i32
    %c0_i32_1 = arith.constant 0 : i32
    return %c0_i32, %c0_i32_0 : i32, i32
  }
  func.func @transform_4(%arg0: i32) -> (i32, i32) {
    %c0_i32 = arith.constant 0 : i32
    %c0_i32_0 = arith.constant 0 : i32
    %c0_i32_1 = arith.constant 0 : i32
    return %c0_i32, %c0_i32_0 : i32, i32
  }
  func.func @transform_5(%arg0: i32) -> (i32, i32) {
    %c0_i32 = arith.constant 0 : i32
    %c0_i32_0 = arith.constant 0 : i32
    %c0_i32_1 = arith.constant 0 : i32
    return %c0_i32, %c0_i32_0 : i32, i32
  }
  func.func @transform_6(%arg0: i32) -> (i32, i32) {
    %c0_i32 = arith.constant 0 : i32
    %c0_i32_0 = arith.constant 0 : i32
    %c0_i32_1 = arith.constant 0 : i32
    return %c0_i32, %c0_i32_0 : i32, i32
  }
  func.func @transform_7(%arg0: i32) -> (i32, i32) {
    %c0_i32 = arith.constant 0 : i32
    %c0_i32_0 = arith.constant 0 : i32
    %c0_i32_1 = arith.constant 0 : i32
    return %c0_i32, %c0_i32_0 : i32, i32
  }
  func.func @transform_8(%arg0: i32) -> (i32, i32) {
    %c0_i32 = arith.constant 0 : i32
    %c0_i32_0 = arith.constant 0 : i32
    %c0_i32_1 = arith.constant 0 : i32
    return %c0_i32, %c0_i32_0 : i32, i32
  }
  func.func @transform_9(%arg0: i32) -> (i32, i32) {
    %c0_i32 = arith.constant 0 : i32
    %c0_i32_0 = arith.constant 0 : i32
    return %arg0, %c0_i32 : i32, i32
  }
}

</mosaic_0001>

<llo_original>
// kernel: tpu_custom_call.1
$region0: #{tpu_custom_call.1}
  #allocation0 [shape = 'u32[]', space=smem, size = 0x4, offset = 0x4, fixed_abs, tag = 'smem constant byte address 0x4 - core index']
  #allocation1 [shape = 'u32[144,128]{1,0:T(1,128)}', space=vmem, size = 0x12000, scoped, tag = 'internal scratch']
  %s0 = inlined_call_operand.hbm [shape: bf16[16,256], index: 0, kind: input, shape index: {}]
  %s1 = inlined_call_operand.hbm [shape: bf16[256,128], index: 1, kind: input, shape index: {}]
  %s2 = inlined_call_operand.vmem [shape: f32[1,128], index: 2, kind: input, shape index: {}]
  %s3 = inlined_call_operand.hbm [shape: bf16[128,128], index: 3, kind: input, shape index: {}]
  %s4 = inlined_call_operand.vmem [shape: f32[1,128], index: 4, kind: input, shape index: {}]
  %s5 = inlined_call_operand.hbm [shape: bf16[128,128], index: 5, kind: input, shape index: {}]
  %s6 = inlined_call_operand.vmem [shape: f32[1,128], index: 6, kind: input, shape index: {}]
  %s7 = inlined_call_operand.hbm [shape: bf16[128,128], index: 7, kind: input, shape index: {}]
  %s8 = inlined_call_operand.vmem [shape: f32[1,128], index: 8, kind: input, shape index: {}]
  %s9 = inlined_call_operand.hbm [shape: f32[16,128], index: 9, kind: output, shape index: {}]
  %s10 = sld [smem:[#allocation0]]
  $region66: #{tpu_custom_call.1} parent=0
    _
  %s12 = ssub.s32 1, %s10
  %s13 = scalar_select 0, %s12, %s10
  $region1: #{tpu_custom_call.1} parent=0
    #allocation2 [shape = 'u8[8192]{0}', space=vmem, size = 0x2000, scoped, tag = 'input window, operand 0, single buffered']
    #allocation3 [shape = 's32[1]{0}', space=sflag, size = 0x4, scoped, tag = 'scoped memory for tpu_custom_call.1']
    #allocation4 [shape = 's32[1]{0}', space=sflag, size = 0x4, scoped, tag = 'scoped memory for tpu_custom_call.1']
    #allocation5 [shape = 'u8[65536]{0}', space=vmem, size = 0x10000, scoped, tag = 'input window, operand 1, single buffered']
    #allocation6 [shape = 's32[1]{0}', space=sflag, size = 0x4, scoped, tag = 'scoped memory for tpu_custom_call.1']
    #allocation7 [shape = 'u8[32768]{0}', space=vmem, size = 0x8000, scoped, tag = 'input window, operand 3, single buffered']
    #allocation8 [shape = 'u8[32768]{0}', space=vmem, size = 0x8000, scoped, tag = 'input window, operand 5, single buffered']
    #allocation9 [shape = 's32[1]{0}', space=sflag, size = 0x4, scoped, tag = 'scoped memory for tpu_custom_call.1']
    #allocation10 [shape = 'u8[32768]{0}', space=vmem, size = 0x8000, scoped, tag = 'input window, operand 7, single buffered']
    #allocation11 [shape = 'u8[8192]{0}', space=vmem, size = 0x2000, scoped, tag = 'output window, operand 0, single buffered']
    %14 = vsyncpa [#allocation3], 0
    %15 = vsyncpa [#allocation6], 0
    %16 = vsyncpa [#allocation9], 0
    %17 = vsyncpa [#allocation4], 0
    // Predicated region
    $region2: #{tpu_custom_call.1} parent=1 // pred_check
      _
    $region3: #{tpu_custom_call.1} parent=1 // pred_check_branch
      %19 = sbr.rel (0) target = $region5
    $region4: #{tpu_custom_call.1} parent=1 // pred_region
      %s21 = ssub.s32 256, 256
      %22 = vsyncadd [#allocation3], %s21
      %s23 = sshll.u32 [#allocation2], 4
      %s24 = int_to_ptr.vmem [resolvable:$true] %s23
      %29 = dma.hbm_to_vmem [thread:$0]  %s0, 256, %s24, [#allocation3], 128, 128, 8
    $region5: #{tpu_custom_call.1} parent=1 // pred_fallthru
      _
    // Predicated region
    $region6: #{tpu_custom_call.1} parent=1 // pred_check
      _
    $region7: #{tpu_custom_call.1} parent=1 // pred_check_branch
      %31 = sbr.rel (0) target = $region9
    $region8: #{tpu_custom_call.1} parent=1 // pred_region
      %s33 = ssub.s32 2048, 2048
      %34 = vsyncadd [#allocation6], %s33
      %s35 = sshll.u32 [#allocation5], 4
      %s36 = int_to_ptr.vmem [resolvable:$true] %s35
      %41 = dma.hbm_to_vmem [thread:$0]  %s1, 2048, %s36, [#allocation6], 64, 64, 4
    $region9: #{tpu_custom_call.1} parent=1 // pred_fallthru
      _
    // Predicated region
    $region10: #{tpu_custom_call.1} parent=1 // pred_check
      _
    $region11: #{tpu_custom_call.1} parent=1 // pred_check_branch
      %43 = sbr.rel (0) target = $region13
    $region12: #{tpu_custom_call.1} parent=1 // pred_region
      _
    $region13: #{tpu_custom_call.1} parent=1 // pred_fallthru
      _
    // Predicated region
    $region14: #{tpu_custom_call.1} parent=1 // pred_check
      _
    $region15: #{tpu_custom_call.1} parent=1 // pred_check_branch
      %45 = sbr.rel (0) target = $region17
    $region16: #{tpu_custom_call.1} parent=1 // pred_region
      %s47 = ssub.s32 1024, 1024
      %48 = vsyncadd [#allocation6], %s47
      %s49 = sshll.u32 [#allocation7], 4
      %s50 = int_to_ptr.vmem [resolvable:$true] %s49
      %55 = dma.hbm_to_vmem [thread:$0]  %s3, 1024, %s50, [#allocation6], 64, 64, 4
    $region17: #{tpu_custom_call.1} parent=1 // pred_fallthru
      _
    // Predicated region
    $region18: #{tpu_custom_call.1} parent=1 // pred_check
      _
    $region19: #{tpu_custom_call.1} parent=1 // pred_check_branch
      %57 = sbr.rel (0) target = $region21
    $region20: #{tpu_custom_call.1} parent=1 // pred_region
      _
    $region21: #{tpu_custom_call.1} parent=1 // pred_fallthru
      _
    // Predicated region
    $region22: #{tpu_custom_call.1} parent=1 // pred_check
      _
    $region23: #{tpu_custom_call.1} parent=1 // pred_check_branch
      %59 = sbr.rel (0) target = $region25
    $region24: #{tpu_custom_call.1} parent=1 // pred_region
      %s61 = ssub.s32 1024, 1024
      %62 = vsyncadd [#allocation9], %s61
      %s63 = sshll.u32 [#allocation8], 4
      %s64 = int_to_ptr.vmem [resolvable:$true] %s63
      %69 = dma.hbm_to_vmem [thread:$0]  %s5, 1024, %s64, [#allocation9], 64, 64, 4
    $region25: #{tpu_custom_call.1} parent=1 // pred_fallthru
      _
    // Predicated region
    $region26: #{tpu_custom_call.1} parent=1 // pred_check
      _
    $region27: #{tpu_custom_call.1} parent=1 // pred_check_branch
      %71 = sbr.rel (0) target = $region29
    $region28: #{tpu_custom_call.1} parent=1 // pred_region
      _
    $region29: #{tpu_custom_call.1} parent=1 // pred_fallthru
      _
    // Predicated region
    $region30: #{tpu_custom_call.1} parent=1 // pred_check
      _
    $region31: #{tpu_custom_call.1} parent=1 // pred_check_branch
      %73 = sbr.rel (0) target = $region33
    $region32: #{tpu_custom_call.1} parent=1 // pred_region
      %s75 = ssub.s32 1024, 1024
      %76 = vsyncadd [#allocation9], %s75
      %s77 = sshll.u32 [#allocation10], 4
      %s78 = int_to_ptr.vmem [resolvable:$true] %s77
      %83 = dma.hbm_to_vmem [thread:$0]  %s7, 1024, %s78, [#allocation9], 64, 64, 4
    $region33: #{tpu_custom_call.1} parent=1 // pred_fallthru
      _
    // Predicated region
    $region34: #{tpu_custom_call.1} parent=1 // pred_check
      _
    $region35: #{tpu_custom_call.1} parent=1 // pred_check_branch
      %85 = sbr.rel (0) target = $region37
    $region36: #{tpu_custom_call.1} parent=1 // pred_region
      _
    $region37: #{tpu_custom_call.1} parent=1 // pred_fallthru
      _
    // Predicated region
    $region38: #{tpu_custom_call.1} parent=1 // pred_check
      _
    $region39: #{tpu_custom_call.1} parent=1 // pred_check_branch
      %87 = sbr.rel (0) target = $region41
    $region40: #{tpu_custom_call.1} parent=1 // pred_region
      %88 = dma.done [#allocation3], 256
    $region41: #{tpu_custom_call.1} parent=1 // pred_fallthru
      _
    // Predicated region
    $region42: #{tpu_custom_call.1} parent=1 // pred_check
      _
    $region43: #{tpu_custom_call.1} parent=1 // pred_check_branch
      %90 = sbr.rel (0) target = $region45
    $region44: #{tpu_custom_call.1} parent=1 // pred_region
      %91 = dma.done [#allocation6], 2048
    $region45: #{tpu_custom_call.1} parent=1 // pred_fallthru
      _
    // Predicated region
    $region46: #{tpu_custom_call.1} parent=1 // pred_check
      _
    $region47: #{tpu_custom_call.1} parent=1 // pred_check_branch
      %93 = sbr.rel (0) target = $region49
    $region48: #{tpu_custom_call.1} parent=1 // pred_region
      %94 = dma.done [#allocation6], 1024
    $region49: #{tpu_custom_call.1} parent=1 // pred_fallthru
      _
    // Predicated region
    $region50: #{tpu_custom_call.1} parent=1 // pred_check
      _
    $region51: #{tpu_custom_call.1} parent=1 // pred_check_branch
      %96 = sbr.rel (0) target = $region53
    $region52: #{tpu_custom_call.1} parent=1 // pred_region
      %97 = dma.done [#allocation9], 1024
    $region53: #{tpu_custom_call.1} parent=1 // pred_fallthru
      _
    // Predicated region
    $region54: #{tpu_custom_call.1} parent=1 // pred_check
      _
    $region55: #{tpu_custom_call.1} parent=1 // pred_check_branch
      %99 = sbr.rel (0) target = $region57
    $region56: #{tpu_custom_call.1} parent=1 // pred_region
      %100 = dma.done [#allocation9], 1024
    $region57: #{tpu_custom_call.1} parent=1 // pred_fallthru
      _
    %v102 = vld [vmem:[#allocation2] sm:$0xff]
    %v103 = vld [vmem:[#allocation2 + $0x8] sm:$0xff]
    %v104 = vld [vmem:[#allocation5] sm:$0xf]
    %v105 = vld [vmem:[#allocation5 + $0x4] sm:$0xf]
    %v106 = vld [vmem:[#allocation5 + $0x8] sm:$0xf]
    %v107 = vld [vmem:[#allocation5 + $0xc] sm:$0xf]
    %v108 = vld [vmem:[#allocation5 + $0x10] sm:$0xf]
    %v109 = vld [vmem:[#allocation5 + $0x14] sm:$0xf]
    %v110 = vld [vmem:[#allocation5 + $0x18] sm:$0xf]
    %v111 = vld [vmem:[#allocation5 + $0x1c] sm:$0xf]
    %v112 = vld [vmem:[#allocation5 + $0x20] sm:$0xf]
    %v113 = vld [vmem:[#allocation5 + $0x24] sm:$0xf]
    %v114 = vld [vmem:[#allocation5 + $0x28] sm:$0xf]
    %v115 = vld [vmem:[#allocation5 + $0x2c] sm:$0xf]
    %v116 = vld [vmem:[#allocation5 + $0x30] sm:$0xf]
    %v117 = vld [vmem:[#allocation5 + $0x34] sm:$0xf]
    %v118 = vld [vmem:[#allocation5 + $0x38] sm:$0xf]
    %v119 = vld [vmem:[#allocation5 + $0x3c] sm:$0xf]
    %v120 = vld [vmem:[#allocation5 + $0x40] sm:$0xf]
    %v121 = vld [vmem:[#allocation5 + $0x44] sm:$0xf]
    %v122 = vld [vmem:[#allocation5 + $0x48] sm:$0xf]
    %v123 = vld [vmem:[#allocation5 + $0x4c] sm:$0xf]
    %v124 = vld [vmem:[#allocation5 + $0x50] sm:$0xf]
    %v125 = vld [vmem:[#allocation5 + $0x54] sm:$0xf]
    %v126 = vld [vmem:[#allocation5 + $0x58] sm:$0xf]
    %v127 = vld [vmem:[#allocation5 + $0x5c] sm:$0xf]
    %v128 = vld [vmem:[#allocation5 + $0x60] sm:$0xf]
    %v129 = vld [vmem:[#allocation5 + $0x64] sm:$0xf]
    %v130 = vld [vmem:[#allocation5 + $0x68] sm:$0xf]
    %v131 = vld [vmem:[#allocation5 + $0x6c] sm:$0xf]
    %v132 = vld [vmem:[#allocation5 + $0x70] sm:$0xf]
    %v133 = vld [vmem:[#allocation5 + $0x74] sm:$0xf]
    %v134 = vld [vmem:[#allocation5 + $0x78] sm:$0xf]
    %v135 = vld [vmem:[#allocation5 + $0x7c] sm:$0xf]
    %v136 = vld [vmem:[%s2] sm:$0x1]
    %v138 = vlaneseq
    %v139 = vshrl.u32 %v138, 7
    %v140 = vsub.s32 0, %v139
    %v141 = vrot.slane %v136, %v140
    %v145 = vunpack.c.l.b16 %v102
    %v146 = vunpack.c.h.b16 %v102
    %v147 = vunpack.c.l.b16 %v103
    %v148 = vunpack.c.h.b16 %v103
    %v149 = vpack.c.b16 %v147, %v145
    %v150 = vpack.c.b16 %v148, %v146
    %v185 = vunpack.c.l.b16 %v104
    %v186 = vunpack.c.l.b16 %v105
    %v187 = vunpack.c.l.b16 %v106
    %v188 = vunpack.c.l.b16 %v107
    %v189 = vunpack.c.l.b16 %v108
    %v190 = vunpack.c.l.b16 %v109
    %v191 = vunpack.c.l.b16 %v110
    %v192 = vunpack.c.l.b16 %v111
    %v193 = vunpack.c.l.b16 %v112
    %v194 = vunpack.c.l.b16 %v113
    %v195 = vunpack.c.l.b16 %v114
    %v196 = vunpack.c.l.b16 %v115
    %v197 = vunpack.c.l.b16 %v116
    %v198 = vunpack.c.l.b16 %v117
    %v199 = vunpack.c.l.b16 %v118
    %v200 = vunpack.c.l.b16 %v119
    %v201 = vunpack.c.l.b16 %v120
    %v202 = vunpack.c.l.b16 %v121
    %v203 = vunpack.c.l.b16 %v122
    %v204 = vunpack.c.l.b16 %v123
    %v205 = vunpack.c.l.b16 %v124
    %v206 = vunpack.c.l.b16 %v125
    %v207 = vunpack.c.l.b16 %v126
    %v208 = vunpack.c.l.b16 %v127
    %v209 = vunpack.c.l.b16 %v128
    %v210 = vunpack.c.l.b16 %v129
    %v211 = vunpack.c.l.b16 %v130
    %v212 = vunpack.c.l.b16 %v131
    %v213 = vunpack.c.l.b16 %v132
    %v214 = vunpack.c.l.b16 %v133
    %v215 = vunpack.c.l.b16 %v134
    %v216 = vunpack.c.l.b16 %v135
    %v217 = vpack.c.b16 %v186, %v185
    %v218 = vpack.c.b16 %v188, %v187
    %v219 = vpack.c.b16 %v190, %v189
    %v220 = vpack.c.b16 %v192, %v191
    %v221 = vpack.c.b16 %v194, %v193
    %v222 = vpack.c.b16 %v196, %v195
    %v223 = vpack.c.b16 %v198, %v197
    %v224 = vpack.c.b16 %v200, %v199
    %v225 = vpack.c.b16 %v202, %v201
    %v226 = vpack.c.b16 %v204, %v203
    %v227 = vpack.c.b16 %v206, %v205
    %v228 = vpack.c.b16 %v208, %v207
    %v229 = vpack.c.b16 %v210, %v209
    %v230 = vpack.c.b16 %v212, %v211
    %v231 = vpack.c.b16 %v214, %v213
    %v232 = vpack.c.b16 %v216, %v215
    %249 = vmatprep.subr.bf16.mxu0 0
    %250 = vmatpush1.bf16.msra.mxu0 %v217
    %251 = vmatprep.subr.bf16.mxu0 0
    %252 = vmatpush1.bf16.msra.mxu0 %v218
    %253 = vmatprep.subr.bf16.mxu0 0
    %254 = vmatpush1.bf16.msra.mxu0 %v219
    %255 = vmatprep.subr.bf16.mxu0 0
    %256 = vmatpush1.bf16.msra.mxu0 %v220
    %257 = vmatprep.subr.bf16.mxu0 0
    %258 = vmatpush1.bf16.msra.mxu0 %v221
    %259 = vmatprep.subr.bf16.mxu0 0
    %260 = vmatpush1.bf16.msra.mxu0 %v222
    %261 = vmatprep.subr.bf16.mxu0 0
    %262 = vmatpush1.bf16.msra.mxu0 %v223
    %263 = vmatprep.subr.bf16.mxu0 0
    %264 = vmatpush1.bf16.msra.mxu0 %v224
    %265 = vmatprep.subr.bf16.mxu0 0
    %266 = vmatpush1.bf16.msra.mxu0 %v225
    %267 = vmatprep.subr.bf16.mxu0 0
    %268 = vmatpush1.bf16.msra.mxu0 %v226
    %269 = vmatprep.subr.bf16.mxu0 0
    %270 = vmatpush1.bf16.msra.mxu0 %v227
    %271 = vmatprep.subr.bf16.mxu0 0
    %272 = vmatpush1.bf16.msra.mxu0 %v228
    %273 = vmatprep.subr.bf16.mxu0 0
    %274 = vmatpush1.bf16.msra.mxu0 %v229
    %275 = vmatprep.subr.bf16.mxu0 0
    %276 = vmatpush1.bf16.msra.mxu0 %v230
    %277 = vmatprep.subr.bf16.mxu0 0
    %278 = vmatpush1.bf16.msra.mxu0 %v231
    %279 = vmatprep.subr.bf16.mxu0 0
    %280 = vmatpush1.bf16.msra.mxu0 %v232
    %281 = vmatprep.mubr.bf16.mxu0 %v150
    %282 = vmatmul.mubr.bf16.gmra.mrb[0].mxu0 %v149
    %v283 = vpop.f32.mrb[0].mxu0
    %v284 = vadd.f32 %v141, %v283
    %v285 = vpop.f32.mrb[0].mxu0
    %v286 = vpop.f32.mrb[0].mxu0
    %v287 = vadd.f32 %v141, %v286
    %v288 = vpop.f32.mrb[0].mxu0
    %289 = vdwg.mxu0
    %v290 = vmax.f32 %v284, 0.0
    %v291 = vmax.f32 %v287, 0.0
    %v292 = vpack.c.bf16 %v291, %v290
    %v293 = vld [vmem:[#allocation7] sm:$0xf]
    %v294 = vld [vmem:[#allocation7 + $0x4] sm:$0xf]
    %v295 = vld [vmem:[#allocation7 + $0x8] sm:$0xf]
    %v296 = vld [vmem:[#allocation7 + $0xc] sm:$0xf]
    %v297 = vld [vmem:[#allocation7 + $0x10] sm:$0xf]
    %v298 = vld [vmem:[#allocation7 + $0x14] sm:$0xf]
    %v299 = vld [vmem:[#allocation7 + $0x18] sm:$0xf]
    %v300 = vld [vmem:[#allocation7 + $0x1c] sm:$0xf]
    %v301 = vld [vmem:[#allocation7 + $0x20] sm:$0xf]
    %v302 = vld [vmem:[#allocation7 + $0x24] sm:$0xf]
    %v303 = vld [vmem:[#allocation7 + $0x28] sm:$0xf]
    %v304 = vld [vmem:[#allocation7 + $0x2c] sm:$0xf]
    %v305 = vld [vmem:[#allocation7 + $0x30] sm:$0xf]
    %v306 = vld [vmem:[#allocation7 + $0x34] sm:$0xf]
    %v307 = vld [vmem:[#allocation7 + $0x38] sm:$0xf]
    %v308 = vld [vmem:[#allocation7 + $0x3c] sm:$0xf]
    %v309 = vld [vmem:[%s4] sm:$0x1]
    %v311 = vlaneseq
    %v312 = vshrl.u32 %v311, 7
    %v313 = vsub.s32 0, %v312
    %v314 = vrot.slane %v309, %v313
    %v332 = vunpack.c.l.b16 %v293
    %v333 = vunpack.c.l.b16 %v294
    %v334 = vunpack.c.l.b16 %v295
    %v335 = vunpack.c.l.b16 %v296
    %v336 = vunpack.c.l.b16 %v297
    %v337 = vunpack.c.l.b16 %v298
    %v338 = vunpack.c.l.b16 %v299
    %v339 = vunpack.c.l.b16 %v300
    %v340 = vunpack.c.l.b16 %v301
    %v341 = vunpack.c.l.b16 %v302
    %v342 = vunpack.c.l.b16 %v303
    %v343 = vunpack.c.l.b16 %v304
    %v344 = vunpack.c.l.b16 %v305
    %v345 = vunpack.c.l.b16 %v306
    %v346 = vunpack.c.l.b16 %v307
    %v347 = vunpack.c.l.b16 %v308
    %v348 = vpack.c.b16 %v333, %v332
    %v349 = vpack.c.b16 %v335, %v334
    %v350 = vpack.c.b16 %v337, %v336
    %v351 = vpack.c.b16 %v339, %v338
    %v352 = vpack.c.b16 %v341, %v340
    %v353 = vpack.c.b16 %v343, %v342
    %v354 = vpack.c.b16 %v345, %v344
    %v355 = vpack.c.b16 %v347, %v346
    %364 = vmatprep.subr.bf16.mxu0 0
    %365 = vmatpush1.bf16.msra.mxu0 %v348
    %366 = vmatprep.subr.bf16.mxu0 0
    %367 = vmatpush1.bf16.msra.mxu0 %v349
    %368 = vmatprep.subr.bf16.mxu0 0
    %369 = vmatpush1.bf16.msra.mxu0 %v350
    %370 = vmatprep.subr.bf16.mxu0 0
    %371 = vmatpush1.bf16.msra.mxu0 %v351
    %372 = vmatprep.subr.bf16.mxu0 0
    %373 = vmatpush1.bf16.msra.mxu0 %v352
    %374 = vmatprep.subr.bf16.mxu0 0
    %375 = vmatpush1.bf16.msra.mxu0 %v353
    %376 = vmatprep.subr.bf16.mxu0 0
    %377 = vmatpush1.bf16.msra.mxu0 %v354
    %378 = vmatprep.subr.bf16.mxu0 0
    %379 = vmatpush1.bf16.msra.mxu0 %v355
    %380 = vmatprep.subr.bf16.mxu0 0
    %381 = vmatpush1.bf16.msra.mxu0 0
    %382 = vmatprep.subr.bf16.mxu0 0
    %383 = vmatpush1.bf16.msra.mxu0 0
    %384 = vmatprep.subr.bf16.mxu0 0
    %385 = vmatpush1.bf16.msra.mxu0 0
    %386 = vmatprep.subr.bf16.mxu0 0
    %387 = vmatpush1.bf16.msra.mxu0 0
    %388 = vmatprep.subr.bf16.mxu0 0
    %389 = vmatpush1.bf16.msra.mxu0 0
    %390 = vmatprep.subr.bf16.mxu0 0
    %391 = vmatpush1.bf16.msra.mxu0 0
    %392 = vmatprep.subr.bf16.mxu0 0
    %393 = vmatpush1.bf16.msra.mxu0 0
    %394 = vmatprep.subr.bf16.mxu0 0
    %395 = vmatpush1.bf16.msra.mxu0 0
    %396 = vmatprep.mubr.bf16.mxu0 0
    %397 = vmatmul.mubr.bf16.gmra.mrb[0].mxu0 %v292
    %v398 = vpop.f32.mrb[0].mxu0
    %v399 = vadd.f32 %v314, %v398
    %v400 = vpop.f32.mrb[0].mxu0
    %v401 = vpop.f32.mrb[0].mxu0
    %v402 = vadd.f32 %v314, %v401
    %v403 = vpop.f32.mrb[0].mxu0
    %404 = vdwg.mxu0
    %v405 = vmax.f32 %v399, 0.0
    %v406 = vmax.f32 %v402, 0.0
    %v407 = vpack.c.bf16 %v406, %v405
    %v408 = vld [vmem:[#allocation8] sm:$0xf]
    %v409 = vld [vmem:[#allocation8 + $0x4] sm:$0xf]
    %v410 = vld [vmem:[#allocation8 + $0x8] sm:$0xf]
    %v411 = vld [vmem:[#allocation8 + $0xc] sm:$0xf]
    %v412 = vld [vmem:[#allocation8 + $0x10] sm:$0xf]
    %v413 = vld [vmem:[#allocation8 + $0x14] sm:$0xf]
    %v414 = vld [vmem:[#allocation8 + $0x18] sm:$0xf]
    %v415 = vld [vmem:[#allocation8 + $0x1c] sm:$0xf]
    %v416 = vld [vmem:[#allocation8 + $0x20] sm:$0xf]
    %v417 = vld [vmem:[#allocation8 + $0x24] sm:$0xf]
    %v418 = vld [vmem:[#allocation8 + $0x28] sm:$0xf]
    %v419 = vld [vmem:[#allocation8 + $0x2c] sm:$0xf]
    %v420 = vld [vmem:[#allocation8 + $0x30] sm:$0xf]
    %v421 = vld [vmem:[#allocation8 + $0x34] sm:$0xf]
    %v422 = vld [vmem:[#allocation8 + $0x38] sm:$0xf]
    %v423 = vld [vmem:[#allocation8 + $0x3c] sm:$0xf]
    %v424 = vld [vmem:[%s6] sm:$0x1]
    %v426 = vlaneseq
    %v427 = vshrl.u32 %v426, 7
    %v428 = vsub.s32 0, %v427
    %v429 = vrot.slane %v424, %v428
    %v447 = vunpack.c.l.b16 %v408
    %v448 = vunpack.c.l.b16 %v409
    %v449 = vunpack.c.l.b16 %v410
    %v450 = vunpack.c.l.b16 %v411
    %v451 = vunpack.c.l.b16 %v412
    %v452 = vunpack.c.l.b16 %v413
    %v453 = vunpack.c.l.b16 %v414
    %v454 = vunpack.c.l.b16 %v415
    %v455 = vunpack.c.l.b16 %v416
    %v456 = vunpack.c.l.b16 %v417
    %v457 = vunpack.c.l.b16 %v418
    %v458 = vunpack.c.l.b16 %v419
    %v459 = vunpack.c.l.b16 %v420
    %v460 = vunpack.c.l.b16 %v421
    %v461 = vunpack.c.l.b16 %v422
    %v462 = vunpack.c.l.b16 %v423
    %v463 = vpack.c.b16 %v448, %v447
    %v464 = vpack.c.b16 %v450, %v449
    %v465 = vpack.c.b16 %v452, %v451
    %v466 = vpack.c.b16 %v454, %v453
    %v467 = vpack.c.b16 %v456, %v455
    %v468 = vpack.c.b16 %v458, %v457
    %v469 = vpack.c.b16 %v460, %v459
    %v470 = vpack.c.b16 %v462, %v461
    %479 = vmatprep.subr.bf16.mxu0 0
    %480 = vmatpush1.bf16.msra.mxu0 %v463
    %481 = vmatprep.subr.bf16.mxu0 0
    %482 = vmatpush1.bf16.msra.mxu0 %v464
    %483 = vmatprep.subr.bf16.mxu0 0
    %484 = vmatpush1.bf16.msra.mxu0 %v465
    %485 = vmatprep.subr.bf16.mxu0 0
    %486 = vmatpush1.bf16.msra.mxu0 %v466
    %487 = vmatprep.subr.bf16.mxu0 0
    %488 = vmatpush1.bf16.msra.mxu0 %v467
    %489 = vmatprep.subr.bf16.mxu0 0
    %490 = vmatpush1.bf16.msra.mxu0 %v468
    %491 = vmatprep.subr.bf16.mxu0 0
    %492 = vmatpush1.bf16.msra.mxu0 %v469
    %493 = vmatprep.subr.bf16.mxu0 0
    %494 = vmatpush1.bf16.msra.mxu0 %v470
    %495 = vmatprep.subr.bf16.mxu0 0
    %496 = vmatpush1.bf16.msra.mxu0 0
    %497 = vmatprep.subr.bf16.mxu0 0
    %498 = vmatpush1.bf16.msra.mxu0 0
    %499 = vmatprep.subr.bf16.mxu0 0
    %500 = vmatpush1.bf16.msra.mxu0 0
    %501 = vmatprep.subr.bf16.mxu0 0
    %502 = vmatpush1.bf16.msra.mxu0 0
    %503 = vmatprep.subr.bf16.mxu0 0
    %504 = vmatpush1.bf16.msra.mxu0 0
    %505 = vmatprep.subr.bf16.mxu0 0
    %506 = vmatpush1.bf16.msra.mxu0 0
    %507 = vmatprep.subr.bf16.mxu0 0
    %508 = vmatpush1.bf16.msra.mxu0 0
    %509 = vmatprep.subr.bf16.mxu0 0
    %510 = vmatpush1.bf16.msra.mxu0 0
    %511 = vmatprep.mubr.bf16.mxu0 0
    %512 = vmatmul.mubr.bf16.gmra.mrb[0].mxu0 %v407
    %v513 = vpop.f32.mrb[0].mxu0
    %v514 = vadd.f32 %v429, %v513
    %v515 = vpop.f32.mrb[0].mxu0
    %v516 = vpop.f32.mrb[0].mxu0
    %v517 = vadd.f32 %v429, %v516
    %v518 = vpop.f32.mrb[0].mxu0
    %519 = vdwg.mxu0
    %v520 = vadd.f32 %v514, %v290
    %v521 = vadd.f32 %v517, %v291
    %v522 = vmax.f32 %v520, 0.0
    %v523 = vmax.f32 %v521, 0.0
    %v524 = vpack.c.bf16 %v523, %v522
    %v525 = vld [vmem:[#allocation10] sm:$0xf]
    %v526 = vld [vmem:[#allocation10 + $0x4] sm:$0xf]
    %v527 = vld [vmem:[#allocation10 + $0x8] sm:$0xf]
    %v528 = vld [vmem:[#allocation10 + $0xc] sm:$0xf]
    %v529 = vld [vmem:[#allocation10 + $0x10] sm:$0xf]
    %v530 = vld [vmem:[#allocation10 + $0x14] sm:$0xf]
    %v531 = vld [vmem:[#allocation10 + $0x18] sm:$0xf]
    %v532 = vld [vmem:[#allocation10 + $0x1c] sm:$0xf]
    %v533 = vld [vmem:[#allocation10 + $0x20] sm:$0xf]
    %v534 = vld [vmem:[#allocation10 + $0x24] sm:$0xf]
    %v535 = vld [vmem:[#allocation10 + $0x28] sm:$0xf]
    %v536 = vld [vmem:[#allocation10 + $0x2c] sm:$0xf]
    %v537 = vld [vmem:[#allocation10 + $0x30] sm:$0xf]
    %v538 = vld [vmem:[#allocation10 + $0x34] sm:$0xf]
    %v539 = vld [vmem:[#allocation10 + $0x38] sm:$0xf]
    %v540 = vld [vmem:[#allocation10 + $0x3c] sm:$0xf]
    %v541 = vld [vmem:[%s8] sm:$0x1]
    %v543 = vlaneseq
    %v544 = vshrl.u32 %v543, 7
    %v545 = vsub.s32 0, %v544
    %v546 = vrot.slane %v541, %v545
    %v564 = vunpack.c.l.b16 %v525
    %v565 = vunpack.c.l.b16 %v526
    %v566 = vunpack.c.l.b16 %v527
    %v567 = vunpack.c.l.b16 %v528
    %v568 = vunpack.c.l.b16 %v529
    %v569 = vunpack.c.l.b16 %v530
    %v570 = vunpack.c.l.b16 %v531
    %v571 = vunpack.c.l.b16 %v532
    %v572 = vunpack.c.l.b16 %v533
    %v573 = vunpack.c.l.b16 %v534
    %v574 = vunpack.c.l.b16 %v535
    %v575 = vunpack.c.l.b16 %v536
    %v576 = vunpack.c.l.b16 %v537
    %v577 = vunpack.c.l.b16 %v538
    %v578 = vunpack.c.l.b16 %v539
    %v579 = vunpack.c.l.b16 %v540
    %v580 = vpack.c.b16 %v565, %v564
    %v581 = vpack.c.b16 %v567, %v566
    %v582 = vpack.c.b16 %v569, %v568
    %v583 = vpack.c.b16 %v571, %v570
    %v584 = vpack.c.b16 %v573, %v572
    %v585 = vpack.c.b16 %v575, %v574
    %v586 = vpack.c.b16 %v577, %v576
    %v587 = vpack.c.b16 %v579, %v578
    %596 = vmatprep.subr.bf16.mxu0 0
    %597 = vmatpush1.bf16.msra.mxu0 %v580
    %598 = vmatprep.subr.bf16.mxu0 0
    %599 = vmatpush1.bf16.msra.mxu0 %v581
    %600 = vmatprep.subr.bf16.mxu0 0
    %601 = vmatpush1.bf16.msra.mxu0 %v582
    %602 = vmatprep.subr.bf16.mxu0 0
    %603 = vmatpush1.bf16.msra.mxu0 %v583
    %604 = vmatprep.subr.bf16.mxu0 0
    %605 = vmatpush1.bf16.msra.mxu0 %v584
    %606 = vmatprep.subr.bf16.mxu0 0
    %607 = vmatpush1.bf16.msra.mxu0 %v585
    %608 = vmatprep.subr.bf16.mxu0 0
    %609 = vmatpush1.bf16.msra.mxu0 %v586
    %610 = vmatprep.subr.bf16.mxu0 0
    %611 = vmatpush1.bf16.msra.mxu0 %v587
    %612 = vmatprep.subr.bf16.mxu0 0
    %613 = vmatpush1.bf16.msra.mxu0 0
    %614 = vmatprep.subr.bf16.mxu0 0
    %615 = vmatpush1.bf16.msra.mxu0 0
    %616 = vmatprep.subr.bf16.mxu0 0
    %617 = vmatpush1.bf16.msra.mxu0 0
    %618 = vmatprep.subr.bf16.mxu0 0
    %619 = vmatpush1.bf16.msra.mxu0 0
    %620 = vmatprep.subr.bf16.mxu0 0
    %621 = vmatpush1.bf16.msra.mxu0 0
    %622 = vmatprep.subr.bf16.mxu0 0
    %623 = vmatpush1.bf16.msra.mxu0 0
    %624 = vmatprep.subr.bf16.mxu0 0
    %625 = vmatpush1.bf16.msra.mxu0 0
    %626 = vmatprep.subr.bf16.mxu0 0
    %627 = vmatpush1.bf16.msra.mxu0 0
    %628 = vmatprep.mubr.bf16.mxu0 0
    %629 = vmatmul.mubr.bf16.gmra.mrb[0].mxu0 %v524
    %v630 = vpop.f32.mrb[0].mxu0
    %v631 = vadd.f32 %v546, %v630
    %v632 = vpop.f32.mrb[0].mxu0
    %v633 = vpop.f32.mrb[0].mxu0
    %v634 = vadd.f32 %v546, %v633
    %v635 = vpop.f32.mrb[0].mxu0
    %636 = vdwg.mxu0
    %637 = vst [vmem:[#allocation11] sm:$0xff] %v631
    %638 = vst [vmem:[#allocation11 + $0x8] sm:$0xff] %v634
    // Predicated region
    $region58: #{tpu_custom_call.1} parent=1 // pred_check
      _
    $region59: #{tpu_custom_call.1} parent=1 // pred_check_branch
      %640 = sbr.rel (0) target = $region61
    $region60: #{tpu_custom_call.1} parent=1 // pred_region
      %s642 = ssub.s32 256, 256
      %643 = vsyncadd [#allocation4], %s642
      %s644 = sshll.u32 [#allocation11], 4
      %s645 = int_to_ptr.vmem [resolvable:$true] %s644
      %650 = dma.vmem_to_hbm [thread:$0]  %s645, 256, %s9, [#allocation4], 128, 128, 8
    $region61: #{tpu_custom_call.1} parent=1 // pred_fallthru
      _
    // Predicated region
    $region62: #{tpu_custom_call.1} parent=1 // pred_check
      _
    $region63: #{tpu_custom_call.1} parent=1 // pred_check_branch
      %652 = sbr.rel (0) target = $region65
    $region64: #{tpu_custom_call.1} parent=1 // pred_region
      %653 = dma.done [#allocation4], 256
    $region65: #{tpu_custom_call.1} parent=1 // pred_fallthru
      _
    %654 = vsyncpa [#allocation3], 1
    %655 = vsyncpa [#allocation6], 1
    %656 = vsyncpa [#allocation9], 1
    %657 = vsyncpa [#allocation4], 1

</llo_original>
